<compile_context>
chip_gen: v5e
topology: v5e:2x2
jax: 0.10.0
libtpu: 0.0.40
codegen_flags: <defaults>
</compile_context>

<pallas_src>
import functools

import jax
import jax.numpy as jnp
from jax.experimental import pallas as pl
from jax.experimental.pallas import tpu as pltpu


def _round_up(n, m):
    return ((n + m - 1) // m) * m


def _lora_qkv_kernel(x_ref, wqkv_ref, bqkv_ref, acat_ref, bcat_ref, out_ref, *,
                     compute_dtype):
    # Cast x to bf16 in-kernel (avoids an extra HBM pass in the wrapper).
    x = x_ref[...].astype(compute_dtype)                              # [tm, dim]

    # Base qkv projection: bf16 operands, f32 MXU accumulation; bias in f32.
    qkv = jnp.dot(x, wqkv_ref[...], preferred_element_type=jnp.float32)
    qkv = qkv + bqkv_ref[...]                                         # [tm, 3*dim] f32

    # Fused LoRA: one down-projection for q and v together; B_cat is [2r, 3*dim]
    # with a zero K-block, so the up-projection lands directly in qkv layout.
    low = jnp.dot(x, acat_ref[...], preferred_element_type=jnp.float32)   # [tm, 2r]
    new = jnp.dot(low.astype(compute_dtype), bcat_ref[...],
                  preferred_element_type=jnp.float32)                     # [tm, 3*dim]

    # Single full-width, lane-dense store.
    out_ref[...] = (qkv + new).astype(out_ref.dtype)


def _folded_qkv_kernel(x_ref, w_ref, b_ref, out_ref, *, compute_dtype):
    # Inference path: LoRA already folded into the base weight in the wrapper.
    x = x_ref[...].astype(compute_dtype)
    out_ref[...] = (jnp.dot(x, w_ref[...], preferred_element_type=jnp.float32)
                    + b_ref[...]).astype(out_ref.dtype)


def lora_qkv_forward(x, w_qkv, b_qkv, a_q, b_q, a_v, b_v, *,
                     tile_m=512, compute_dtype=jnp.bfloat16, out_dtype=None,
                     fold_lora=False, vmem_limit_bytes=None):
    """x: [B, H, W, dim] -> [B, H, W, 3*dim].

    Weight conventions (already transposed for right-multiplication):
      w_qkv: [dim, 3*dim]   b_qkv: [3*dim]
      a_q:   [dim, r]       b_q:   [r, dim]
      a_v:   [dim, r]       b_v:   [r, dim]

    out_dtype: defaults to x.dtype (module semantics); pass jnp.bfloat16 to
    halve store bandwidth on v6e/v7x when downstream consumes bf16.
    fold_lora: fold LoRA into Wqkv in the wrapper (static-weight inference);
    removes the narrow-K LoRA matmuls from the kernel entirely.
    """
    B, H, W, dim = x.shape
    r = a_q.shape[1]
    N = B * H * W
    out_dtype = x.dtype if out_dtype is None else out_dtype

    # x stays in its original dtype; reshape to 2-D is free (contiguous).
    x2 = x.reshape(N, dim)

    b_qkv2 = b_qkv.reshape(1, 3 * dim).astype(jnp.float32)

    if fold_lora:
        # W_eff = Wqkv with the LoRA products folded into the q and v slabs.
        w_eff = w_qkv.astype(jnp.float32)
        w_eff = w_eff.at[:, :dim].add(a_q.astype(jnp.float32) @ b_q.astype(jnp.float32))
        w_eff = w_eff.at[:, 2 * dim:].add(a_v.astype(jnp.float32) @ b_v.astype(jnp.float32))
        operands = (x2, w_eff.astype(compute_dtype), b_qkv2)
        kernel = functools.partial(_folded_qkv_kernel, compute_dtype=compute_dtype)
    else:
        # A_cat = [Aq | Av]; B_cat is [2r, 3*dim] block-diagonal with a zero
        # K-block so low @ B_cat == [new_q | 0 | new_v] (qkv layout, no shuffles).
        a_cat = jnp.concatenate([a_q, a_v], axis=1).astype(compute_dtype)   # [dim, 2r]
        b_cat = jnp.zeros((2 * r, 3 * dim), compute_dtype)
        b_cat = b_cat.at[:r, :dim].set(b_q.astype(compute_dtype))
        b_cat = b_cat.at[r:, 2 * dim:].set(b_v.astype(compute_dtype))       # [2r, 3*dim]
        operands = (x2, w_qkv.astype(compute_dtype), b_qkv2, a_cat, b_cat)
        kernel = functools.partial(_lora_qkv_kernel, compute_dtype=compute_dtype)

    x_itemsize = jnp.dtype(x.dtype).itemsize
    o_itemsize = jnp.dtype(out_dtype).itemsize
    weight_bytes = sum(int(op.size) * op.dtype.itemsize for op in operands[1:])

    # Row tiling: cap at (8-aligned) N; keep >=2 grid steps when possible so
    # dimension_semantics=("parallel",) can shard across both v7x TensorCores.
    tile_m = max(8, min(tile_m, _round_up(N, 8)))
    if N > 8 and pl.cdiv(N, tile_m) < 2:
        tile_m = max(8, _round_up(pl.cdiv(N, 2), 8))

    def _vmem_estimate(tm):
        stream = 2 * tm * dim * x_itemsize + 2 * tm * 3 * dim * o_itemsize   # double-buffered x/out tiles
        scratch = 2 * tm * 3 * dim * 4 + tm * dim * 2 + tm * 2 * r * 4       # f32 temps + bf16 x + low
        return 2 * weight_bytes + stream + scratch                           # weights default-double-buffered

    # Per-chip VMEM ceiling (v7x has only 64 MiB per TC; never assume 128).
    try:
        vmem_cap = int(pltpu.get_tpu_info().vmem_capacity_bytes)
    except Exception:  # device-info query only; pallas_call is never guarded.
        vmem_cap = 64 << 20
    vmem_ceiling = (3 * vmem_cap) // 4
    while tile_m > 256 and _vmem_estimate(tile_m) > vmem_ceiling:
        tile_m = _round_up(tile_m // 2, 8)
    if vmem_limit_bytes is None:
        vmem_limit_bytes = int(min(max(_vmem_estimate(tile_m) + (4 << 20), 32 << 20),
                                   vmem_ceiling))

    grid = (pl.cdiv(N, tile_m),)

    flops = 2 * N * dim * 3 * dim + N * 3 * dim
    if not fold_lora:
        flops += 2 * N * dim * 2 * r + 2 * N * 2 * r * 3 * dim + N * 3 * dim
    bytes_accessed = N * dim * x_itemsize + weight_bytes + N * 3 * dim * o_itemsize
    cost = pl.CostEstimate(flops=int(flops), transcendentals=0,
                           bytes_accessed=int(bytes_accessed))

    const_spec = lambda shape: pl.BlockSpec(shape, lambda i: (0, 0))
    in_specs = [pl.BlockSpec((tile_m, dim), lambda i: (i, 0)),   # x tile (original dtype)
                const_spec((dim, 3 * dim)),                      # Wqkv (or W_eff)
                const_spec((1, 3 * dim))]                        # bias (f32)
    if not fold_lora:
        in_specs += [const_spec((dim, 2 * r)),                   # A_cat
                     const_spec((2 * r, 3 * dim))]               # B_cat

    out = pl.pallas_call(
        kernel,
        out_shape=jax.ShapeDtypeStruct((N, 3 * dim), out_dtype),
        grid_spec=pltpu.PrefetchScalarGridSpec(
            num_scalar_prefetch=0,
            grid=grid,
            in_specs=in_specs,
            out_specs=pl.BlockSpec((tile_m, 3 * dim), lambda i: (i, 0)),
        ),
        compiler_params=pltpu.CompilerParams(
            dimension_semantics=("parallel",),
            vmem_limit_bytes=int(vmem_limit_bytes)),
        cost_estimate=cost,
    )(*operands)

    return out.reshape(B, H, W, 3 * dim)


def _reference(x, w_qkv, b_qkv, a_q, b_q, a_v, b_v, compute_dtype=jnp.bfloat16):
    """Pure-JAX reference; models the kernel's bf16 operand rounding (including
    the bf16 round of the low-rank activations) and f32 accumulation."""
    B, H, W, dim = x.shape
    f32 = jnp.float32
    cast = lambda a: a.astype(compute_dtype).astype(f32)
    x2 = cast(x.reshape(-1, dim))
    qkv = x2 @ cast(w_qkv) + b_qkv.astype(f32)
    low_q = cast(x2 @ cast(a_q))
    low_v = cast(x2 @ cast(a_v))
    qkv = qkv.at[:, :dim].add(low_q @ cast(b_q))
    qkv = qkv.at[:, -dim:].add(low_v @ cast(b_v))
    return qkv.reshape(B, H, W, 3 * dim).astype(x.dtype)


if __name__ == "__main__":
    # Small shapes consistent with the module: SAM ViT block input [B, H, W, dim].
    B, H, W, dim, r = 2, 8, 8, 32, 4

    key = jax.random.PRNGKey(0)
    kx, kw, kb, k1, k2, k3, k4 = jax.random.split(key, 7)

    x = jax.random.normal(kx, (B, H, W, dim), dtype=jnp.float32)

    # qkv: nn.Linear(dim, 3*dim, bias=True)  -> stored here transposed [dim, 3*dim]
    w_qkv = jax.random.normal(kw, (dim, 3 * dim), dtype=jnp.float32) * 0.05
    b_qkv = jax.random.normal(kb, (3 * dim,), dtype=jnp.float32) * 0.01

    # LoRA linears (bias=False): A: dim->r, B: r->dim  (stored transposed).
    a_q = jax.random.normal(k1, (dim, r), dtype=jnp.float32) * 0.05
    b_q = jax.random.normal(k2, (r, dim), dtype=jnp.float32) * 0.05
    a_v = jax.random.normal(k3, (dim, r), dtype=jnp.float32) * 0.05
    b_v = jax.random.normal(k4, (r, dim), dtype=jnp.float32) * 0.05

    ref = _reference(x, w_qkv, b_qkv, a_q, b_q, a_v, b_v)

    # Default path (tile_m auto-capped; grid split across >=2 steps).
    out = jax.block_until_ready(lora_qkv_forward(x, w_qkv, b_qkv, a_q, b_q, a_v, b_v))
    assert out.shape == (B, H, W, 3 * dim)
    assert jnp.allclose(out, ref, atol=5e-3, rtol=5e-3), "mismatch vs reference"

    # Ragged last tile (N=128, tile_m=48 -> 3 grid steps, last one partial):
    # exercises the masked boundary writes that replaced the wrapper pad/slice.
    out_ragged = jax.block_until_ready(
        lora_qkv_forward(x, w_qkv, b_qkv, a_q, b_q, a_v, b_v, tile_m=48))
    assert jnp.allclose(out_ragged, ref, atol=5e-3, rtol=5e-3), "ragged-tile mismatch"

    # bf16-output option (store-bandwidth saver on v6e/v7x).
    out_bf16 = jax.block_until_ready(
        lora_qkv_forward(x, w_qkv, b_qkv, a_q, b_q, a_v, b_v, out_dtype=jnp.bfloat16))
    assert jnp.allclose(out_bf16.astype(jnp.float32), ref, atol=2e-2, rtol=2e-2), \
        "bf16-output mismatch"

    # Folded-LoRA inference path (single matmul; slightly different rounding).
    out_fold = jax.block_until_ready(
        lora_qkv_forward(x, w_qkv, b_qkv, a_q, b_q, a_v, b_v, fold_lora=True))
    assert jnp.allclose(out_fold, ref, atol=2e-2, rtol=2e-2), "folded-LoRA mismatch"

    print("KERNEL_OK")
</pallas_src>

<mosaic_0001>
module attributes {stable_mosaic.version = 11 : i64} {
  func.func @_lora_qkv_kernel(%arg0: i32, %arg1: memref<64x32xf32, #tpu.memory_space<vmem>>, %arg2: memref<32x96xbf16, #tpu.memory_space<vmem>>, %arg3: memref<1x96xf32, #tpu.memory_space<vmem>>, %arg4: memref<32x8xbf16, #tpu.memory_space<vmem>>, %arg5: memref<8x96xbf16, #tpu.memory_space<vmem>>, %arg6: memref<64x96xf32, #tpu.memory_space<vmem>>) attributes {dimension_semantics = [#tpu.dimension_semantics<parallel>], iteration_bounds = array<i64: 2>, scalar_prefetch = 0 : i64, scratch_operands = 0 : i64, tpu.core_type = #tpu.core_type<tc>, window_params = [{transform_indices = @transform_0, window_bounds = array<i64: 64, 32>}, {pipeline_mode = #tpu.pipeline_mode<synchronous>, transform_indices = @transform_1, window_bounds = array<i64: 32, 96>}, {pipeline_mode = #tpu.pipeline_mode<synchronous>, transform_indices = @transform_2, window_bounds = array<i64: 1, 96>}, {pipeline_mode = #tpu.pipeline_mode<synchronous>, transform_indices = @transform_3, window_bounds = array<i64: 32, 8>}, {pipeline_mode = #tpu.pipeline_mode<synchronous>, transform_indices = @transform_4, window_bounds = array<i64: 8, 96>}, {transform_indices = @transform_5, window_bounds = array<i64: 64, 96>}]} {
    %c0 = arith.constant 0 : index
    %c0_0 = arith.constant 0 : index
    %0 = vector.load %arg1[%c0, %c0_0] : memref<64x32xf32, #tpu.memory_space<vmem>>, vector<64x32xf32>
    %1 = arith.truncf %0 : vector<64x32xf32> to vector<64x32xbf16>
    %c0_1 = arith.constant 0 : index
    %c0_2 = arith.constant 0 : index
    %2 = vector.load %arg2[%c0_1, %c0_2] : memref<32x96xbf16, #tpu.memory_space<vmem>>, vector<32x96xbf16>
    %cst = arith.constant dense<0.000000e+00> : vector<64x96xf32>
    %3 = tpu.matmul %1, %2, %cst {dimension_numbers = #tpu.dot_dimension_numbers<[1], [0], [0], [1], [0, 0, 1, 1], [], []>} : vector<64x32xbf16>, vector<32x96xbf16>, vector<64x96xf32> -> vector<64x96xf32>
    %c0_3 = arith.constant 0 : index
    %c0_4 = arith.constant 0 : index
    %4 = vector.load %arg3[%c0_3, %c0_4] : memref<1x96xf32, #tpu.memory_space<vmem>>, vector<1x96xf32>
    %5 = vector.broadcast %4 : vector<1x96xf32> to vector<64x96xf32>
    %6 = arith.addf %3, %5 : vector<64x96xf32>
    %c0_5 = arith.constant 0 : index
    %c0_6 = arith.constant 0 : index
    %7 = vector.load %arg4[%c0_5, %c0_6] : memref<32x8xbf16, #tpu.memory_space<vmem>>, vector<32x8xbf16>
    %cst_7 = arith.constant dense<0.000000e+00> : vector<64x8xf32>
    %8 = tpu.matmul %1, %7, %cst_7 {dimension_numbers = #tpu.dot_dimension_numbers<[1], [0], [0], [1], [0, 0, 1, 1], [], []>} : vector<64x32xbf16>, vector<32x8xbf16>, vector<64x8xf32> -> vector<64x8xf32>
    %9 = arith.truncf %8 : vector<64x8xf32> to vector<64x8xbf16>
    %c0_8 = arith.constant 0 : index
    %c0_9 = arith.constant 0 : index
    %10 = vector.load %arg5[%c0_8, %c0_9] : memref<8x96xbf16, #tpu.memory_space<vmem>>, vector<8x96xbf16>
    %cst_10 = arith.constant dense<0.000000e+00> : vector<64x96xf32>
    %11 = tpu.matmul %9, %10, %cst_10 {dimension_numbers = #tpu.dot_dimension_numbers<[1], [0], [0], [1], [0, 0, 1, 1], [], []>} : vector<64x8xbf16>, vector<8x96xbf16>, vector<64x96xf32> -> vector<64x96xf32>
    %12 = arith.addf %6, %11 : vector<64x96xf32>
    %c0_11 = arith.constant 0 : index
    %c0_12 = arith.constant 0 : index
    %13 = vector.load %arg6[%c0_11, %c0_12] : memref<64x96xf32, #tpu.memory_space<vmem>>, vector<64x96xf32>
    tpu.vector_store %arg6[%c0_11, %c0_12], %12 {strides = array<i32>} : memref<64x96xf32, #tpu.memory_space<vmem>>, vector<64x96xf32>,
    return
  }
  func.func @transform_0(%arg0: i32) -> (i32, i32) {
    %c0_i32 = arith.constant 0 : i32
    %c0_i32_0 = arith.constant 0 : i32
    return %arg0, %c0_i32 : i32, i32
  }
  func.func @transform_1(%arg0: i32) -> (i32, i32) {
    %c0_i32 = arith.constant 0 : i32
    %c0_i32_0 = arith.constant 0 : i32
    %c0_i32_1 = arith.constant 0 : i32
    return %c0_i32, %c0_i32_0 : i32, i32
  }
  func.func @transform_2(%arg0: i32) -> (i32, i32) {
    %c0_i32 = arith.constant 0 : i32
    %c0_i32_0 = arith.constant 0 : i32
    %c0_i32_1 = arith.constant 0 : i32
    return %c0_i32, %c0_i32_0 : i32, i32
  }
  func.func @transform_3(%arg0: i32) -> (i32, i32) {
    %c0_i32 = arith.constant 0 : i32
    %c0_i32_0 = arith.constant 0 : i32
    %c0_i32_1 = arith.constant 0 : i32
    return %c0_i32, %c0_i32_0 : i32, i32
  }
  func.func @transform_4(%arg0: i32) -> (i32, i32) {
    %c0_i32 = arith.constant 0 : i32
    %c0_i32_0 = arith.constant 0 : i32
    %c0_i32_1 = arith.constant 0 : i32
    return %c0_i32, %c0_i32_0 : i32, i32
  }
  func.func @transform_5(%arg0: i32) -> (i32, i32) {
    %c0_i32 = arith.constant 0 : i32
    %c0_i32_0 = arith.constant 0 : i32
    return %arg0, %c0_i32 : i32, i32
  }
}

</mosaic_0001>

<llo_original>
// kernel: tpu_custom_call.1
$region0: #{tpu_custom_call.1}
  #allocation0 [shape = 'u32[]', space=smem, size = 0x4, offset = 0x4, fixed_abs, tag = 'smem constant byte address 0x4 - core index']
  #allocation1 [shape = 'u32[72,128]{1,0:T(1,128)}', space=vmem, size = 0x9000, scoped, tag = 'internal scratch']
  %s0 = inlined_call_operand.vmem [shape: f32[128,32], index: 0, kind: input, shape index: {}]
  %s1 = inlined_call_operand.vmem [shape: bf16[32,96], index: 1, kind: input, shape index: {}]
  %s2 = inlined_call_operand.vmem [shape: f32[1,96], index: 2, kind: input, shape index: {}]
  %s3 = inlined_call_operand.vmem [shape: bf16[32,8], index: 3, kind: input, shape index: {}]
  %s4 = inlined_call_operand.vmem [shape: bf16[8,96], index: 4, kind: input, shape index: {}]
  %s5 = inlined_call_operand.vmem [shape: f32[128,96], index: 5, kind: output, shape index: {}]
  %s6 = sld [smem:[#allocation0]]
  $region53: #{tpu_custom_call.1} parent=0
    _
  %s8 = ssub.s32 1, %s6
  %s9 = scalar_select 0, %s8, %s6
  loop: start=0, step=1, limit=4
  $region2: #{tpu_custom_call.1} parent=0 // loop_pre_header
    _
  $region3: #{tpu_custom_call.1} parent=0 // loop_header
    %s11 = sphi 0, %s15
    %p12 = scmp.ge.s32.totalorder %s11, 4
    %s21 = sphi 0, %s23
    %s24 = sphi 0, %s21
    %s25 = sphi 0, %s24
    %s41 = sphi 0, %s25
    %s45 = sphi 0, %s45
    %s47 = sphi 0, %s45
    %s48 = sphi 0, %s47
    %s62 = sphi 0, %s48
    %s66 = sphi 0, %s66
    %s68 = sphi 0, %s66
    %s69 = sphi 0, %s68
    %s83 = sphi 0, %s69
    %s87 = sphi 0, %s87
    %s89 = sphi 0, %s87
    %s90 = sphi 0, %s89
    %s104 = sphi 0, %s90
    %s108 = sphi 0, %s108
    %s110 = sphi 0, %s108
    %s111 = sphi 0, %s110
    %s125 = sphi 0, %s111
    %s131 = sphi 0, %s133
    %s134 = sphi 0, %s131
    %s135 = sphi 0, %s134
    %s151 = sphi 0, %s135
  $region4: #{tpu_custom_call.1} parent=0 // loop_header_branch
    %14 = sbr.rel (%p12) target = $region8
  $region5: #{tpu_custom_call.1} parent=0 // loop_body
    %s16 = ssub.s32 %s11, 1
    %s17 = ssub.s32 %s11, 2
    %s18 = sadd.s32 %s11, 1
    %s19 = ssub.s32 %s11, %s18
    %p20 = scmp.eq.s32.totalorder %s19, 0
    %s22 = sadd.s32 %s21, 1
    %s23 = scalar_select %p20, %s21, %s22
    %p26 = pneg %p20
    %p27 = scmp.eq.s32.totalorder %s11, 1
    %p28 = por %p26, %p27
    %p29 = scmp.ne.s32.totalorder %s21, %s24
    %p30 = scmp.eq.s32.totalorder %s11, 0
    %p31 = por %p29, %p30
    %p32 = scmp.ne.s32.totalorder %s21, %s24
    %p33 = scmp.eq.s32.totalorder %s16, 1
    %p34 = por %p32, %p33
    %p35 = scmp.ne.s32.totalorder %s24, %s25
    %p36 = scmp.eq.s32.totalorder %s16, 0
    %p37 = por %p35, %p36
    %p38 = scmp.ne.s32.totalorder %s24, %s25
    %p39 = scmp.eq.s32.totalorder %s17, 1
    %p40 = por %p38, %p39
    %p42 = scmp.ne.s32.totalorder %s25, %s41
    %p43 = scmp.eq.s32.totalorder %s17, 0
    %p44 = por %p42, %p43
    %s46 = sadd.s32 %s45, 1
    %p49 = scmp.eq.s32.totalorder %s11, 1
    %p50 = scmp.ne.s32.totalorder %s45, %s47
    %p51 = scmp.eq.s32.totalorder %s11, 0
    %p52 = por %p50, %p51
    %p53 = scmp.ne.s32.totalorder %s45, %s47
    %p54 = scmp.eq.s32.totalorder %s16, 1
    %p55 = por %p53, %p54
    %p56 = scmp.ne.s32.totalorder %s47, %s48
    %p57 = scmp.eq.s32.totalorder %s16, 0
    %p58 = por %p56, %p57
    %p59 = scmp.ne.s32.totalorder %s47, %s48
    %p60 = scmp.eq.s32.totalorder %s17, 1
    %p61 = por %p59, %p60
    %p63 = scmp.ne.s32.totalorder %s48, %s62
    %p64 = scmp.eq.s32.totalorder %s17, 0
    %p65 = por %p63, %p64
    %s67 = sadd.s32 %s66, 1
    %p70 = scmp.eq.s32.totalorder %s11, 1
    %p71 = scmp.ne.s32.totalorder %s66, %s68
    %p72 = scmp.eq.s32.totalorder %s11, 0
    %p73 = por %p71, %p72
    %p74 = scmp.ne.s32.totalorder %s66, %s68
    %p75 = scmp.eq.s32.totalorder %s16, 1
    %p76 = por %p74, %p75
    %p77 = scmp.ne.s32.totalorder %s68, %s69
    %p78 = scmp.eq.s32.totalorder %s16, 0
    %p79 = por %p77, %p78
    %p80 = scmp.ne.s32.totalorder %s68, %s69
    %p81 = scmp.eq.s32.totalorder %s17, 1
    %p82 = por %p80, %p81
    %p84 = scmp.ne.s32.totalorder %s69, %s83
    %p85 = scmp.eq.s32.totalorder %s17, 0
    %p86 = por %p84, %p85
    %s88 = sadd.s32 %s87, 1
    %p91 = scmp.eq.s32.totalorder %s11, 1
    %p92 = scmp.ne.s32.totalorder %s87, %s89
    %p93 = scmp.eq.s32.totalorder %s11, 0
    %p94 = por %p92, %p93
    %p95 = scmp.ne.s32.totalorder %s87, %s89
    %p96 = scmp.eq.s32.totalorder %s16, 1
    %p97 = por %p95, %p96
    %p98 = scmp.ne.s32.totalorder %s89, %s90
    %p99 = scmp.eq.s32.totalorder %s16, 0
    %p100 = por %p98, %p99
    %p101 = scmp.ne.s32.totalorder %s89, %s90
    %p102 = scmp.eq.s32.totalorder %s17, 1
    %p103 = por %p101, %p102
    %p105 = scmp.ne.s32.totalorder %s90, %s104
    %p106 = scmp.eq.s32.totalorder %s17, 0
    %p107 = por %p105, %p106
    %s109 = sadd.s32 %s108, 1
    %p112 = scmp.eq.s32.totalorder %s11, 1
    %p113 = scmp.ne.s32.totalorder %s108, %s110
    %p114 = scmp.eq.s32.totalorder %s11, 0
    %p115 = por %p113, %p114
    %p116 = scmp.ne.s32.totalorder %s108, %s110
    %p117 = scmp.eq.s32.totalorder %s16, 1
    %p118 = por %p116, %p117
    %p119 = scmp.ne.s32.totalorder %s110, %s111
    %p120 = scmp.eq.s32.totalorder %s16, 0
    %p121 = por %p119, %p120
    %p122 = scmp.ne.s32.totalorder %s110, %s111
    %p123 = scmp.eq.s32.totalorder %s17, 1
    %p124 = por %p122, %p123
    %p126 = scmp.ne.s32.totalorder %s111, %s125
    %p127 = scmp.eq.s32.totalorder %s17, 0
    %p128 = por %p126, %p127
    %s129 = ssub.s32 %s11, %s18
    %p130 = scmp.eq.s32.totalorder %s129, 0
    %s132 = sadd.s32 %s131, 1
    %s133 = scalar_select %p130, %s131, %s132
    %p136 = pneg %p130
    %p137 = scmp.eq.s32.totalorder %s11, 1
    %p138 = por %p136, %p137
    %p139 = scmp.ne.s32.totalorder %s131, %s134
    %p140 = scmp.eq.s32.totalorder %s11, 0
    %p141 = por %p139, %p140
    %p142 = scmp.ne.s32.totalorder %s131, %s134
    %p143 = scmp.eq.s32.totalorder %s16, 1
    %p144 = por %p142, %p143
    %p145 = scmp.ne.s32.totalorder %s134, %s135
    %p146 = scmp.eq.s32.totalorder %s16, 0
    %p147 = por %p145, %p146
    %p148 = scmp.ne.s32.totalorder %s134, %s135
    %p149 = scmp.eq.s32.totalorder %s17, 1
    %p150 = por %p148, %p149
    %p152 = scmp.ne.s32.totalorder %s135, %s151
    %p153 = scmp.eq.s32.totalorder %s17, 0
    %p154 = por %p152, %p153
    %p155 = scmp.le.s32.totalorder 1, %s11
    %p156 = scmp.lt.s32.totalorder %s11, 3
    %p157 = pnand %p155, %p156
    %p158 = pneg %p157
    // Predicated region
    $region9: #{tpu_custom_call.1} parent=5 // pred_check
      _
    $region10: #{tpu_custom_call.1} parent=5 // pred_check_branch
      %160 = sbr.rel (%p157) target = $region12
    $region11: #{tpu_custom_call.1} parent=5 // pred_region
      %s161 = ssub.s32 %s11, 1
      // Predicated region
      $region13: #{tpu_custom_call.1} parent=11 // pred_check
        %p162 = pneg %p58
      $region14: #{tpu_custom_call.1} parent=11 // pred_check_branch
        %164 = sbr.rel (%p162) target = $region16
      $region15: #{tpu_custom_call.1} parent=11 // pred_region
        _
      $region16: #{tpu_custom_call.1} parent=11 // pred_fallthru
        _
      // Predicated region
      $region17: #{tpu_custom_call.1} parent=11 // pred_check
        %p165 = pneg %p79
      $region18: #{tpu_custom_call.1} parent=11 // pred_check_branch
        %167 = sbr.rel (%p165) target = $region20
      $region19: #{tpu_custom_call.1} parent=11 // pred_region
        _
      $region20: #{tpu_custom_call.1} parent=11 // pred_fallthru
        _
      // Predicated region
      $region21: #{tpu_custom_call.1} parent=11 // pred_check
        %p168 = pneg %p100
      $region22: #{tpu_custom_call.1} parent=11 // pred_check_branch
        %170 = sbr.rel (%p168) target = $region24
      $region23: #{tpu_custom_call.1} parent=11 // pred_region
        _
      $region24: #{tpu_custom_call.1} parent=11 // pred_fallthru
        _
      // Predicated region
      $region25: #{tpu_custom_call.1} parent=11 // pred_check
        %p171 = pneg %p121
      $region26: #{tpu_custom_call.1} parent=11 // pred_check_branch
        %173 = sbr.rel (%p171) target = $region28
      $region27: #{tpu_custom_call.1} parent=11 // pred_region
        _
      $region28: #{tpu_custom_call.1} parent=11 // pred_fallthru
        _
    $region12: #{tpu_custom_call.1} parent=5 // pred_fallthru
      _
    %p174 = scmp.lt.s32.totalorder %s11, 2
    // Predicated region
    $region29: #{tpu_custom_call.1} parent=5 // pred_check
      %p175 = pneg %p174
    $region30: #{tpu_custom_call.1} parent=5 // pred_check_branch
      %177 = sbr.rel (%p175) target = $region32
    $region31: #{tpu_custom_call.1} parent=5 // pred_region
      // Predicated region
      $region33: #{tpu_custom_call.1} parent=31 // pred_check
        %p178 = pneg %p31
      $region34: #{tpu_custom_call.1} parent=31 // pred_check_branch
        %180 = sbr.rel (%p178) target = $region36
      $region35: #{tpu_custom_call.1} parent=31 // pred_region
        %s181 = smul.u32 8, %s11
        %p182 = scmp.lt.s32.totalorder %s181, 15
        %s183 = scalar_select %p182, %s181, 15
        %s184 = smul.addr %s183, 8
        %s185 = scalar_lea.vmem %s0, %s184
        %s186 = smul.u32 8, %s11
      $region36: #{tpu_custom_call.1} parent=31 // pred_fallthru
        _
    $region32: #{tpu_custom_call.1} parent=5 // pred_fallthru
      _
    %p187 = scmp.le.s32.totalorder 1, %s11
    %p188 = scmp.lt.s32.totalorder %s11, 3
    %p189 = pnand %p187, %p188
    %p190 = pneg %p189
    // Predicated region
    $region37: #{tpu_custom_call.1} parent=5 // pred_check
      _
    $region38: #{tpu_custom_call.1} parent=5 // pred_check_branch
      %192 = sbr.rel (%p189) target = $region40
    $region39: #{tpu_custom_call.1} parent=5 // pred_region
      %s193 = ssub.s32 %s11, 1
      %s194 = smul.u32 8, %s16
      %p195 = scmp.lt.s32.totalorder %s194, 15
      %s196 = scalar_select %p195, %s194, 15
      %s197 = smul.addr %s196, 8
      %s198 = scalar_lea.vmem %s0, %s197
      %p199 = pneg %p37
      %p200 = pneg %p34
      %p201 = pneg %p58
      %p202 = pneg %p55
      %p203 = pneg %p79
      %p204 = pneg %p76
      %p205 = pneg %p100
      %p206 = pneg %p97
      %p207 = pneg %p121
      %p208 = pneg %p118
      %p209 = pneg %p147
      %p210 = pneg %p144
      %s211 = smul.u32 8, %s16
      %p212 = scmp.lt.s32.totalorder %s211, 15
      %s213 = scalar_select %p212, %s211, 15
      %s214 = smul.addr %s213, 8
      %s215 = scalar_lea.vmem %s5, %s214
      %s216 = smul.u32 8, %s16
      %p217 = scmp.lt.s32.totalorder %s216, 15
      %s218 = scalar_select %p217, %s216, 15
      %s219 = smul.addr %s218, 8
      %s220 = scalar_lea.vmem %s0, %s219
      %s221 = smul.u32 8, %s16
      %s222 = smul.u32 8, %s16
      %p223 = scmp.lt.s32.totalorder %s222, 15
      %s224 = scalar_select %p223, %s222, 15
      %s225 = smul.addr %s224, 8
      %s226 = scalar_lea.vmem %s5, %s225
      %s227 = smul.u32 8, %s16
      %v229 = vld [vmem:[%s220] sm:$0xff]
      %v230 = vld [vmem:[%s220 + $0x8] sm:$0xff]
      %v231 = vld [vmem:[%s220 + $0x10] sm:$0xff]
      %v232 = vld [vmem:[%s220 + $0x18] sm:$0xff]
      %v233 = vld [vmem:[%s220 + $0x20] sm:$0xff]
      %v234 = vld [vmem:[%s220 + $0x28] sm:$0xff]
      %v235 = vld [vmem:[%s220 + $0x30] sm:$0xff]
      %v236 = vld [vmem:[%s220 + $0x38] sm:$0xff]
      %v237 = vpack.c.bf16 %v230, %v229
      %v238 = vpack.c.bf16 %v232, %v231
      %v239 = vpack.c.bf16 %v234, %v233
      %v240 = vpack.c.bf16 %v236, %v235
      %v241 = vld [vmem:[%s1] sm:$0xf]
      %v242 = vld [vmem:[%s1 + $0x4] sm:$0xf]
      %v243 = vld [vmem:[%s1 + $0x8] sm:$0xf]
      %v244 = vld [vmem:[%s1 + $0xc] sm:$0xf]
      %v245 = vld [vmem:[%s2] sm:$0x1]
      %v247 = vperm.slane %v245, 0
      %v253 = vunpack.c.l.b16 %v241
      %v254 = vunpack.c.l.b16 %v242
      %v255 = vunpack.c.l.b16 %v243
      %v256 = vunpack.c.l.b16 %v244
      %v257 = vpack.c.b16 %v254, %v253
      %v258 = vpack.c.b16 %v256, %v255
      %vm261 = vcmask 261120
      %v263 = vsel %vm261, %v237, 0
      %v266 = vsel %vm261, %v238, 0
      %v269 = vsel %vm261, %v239, 0
      %v272 = vsel %vm261, %v240, 0
      %274 = vmatpush.bf16.msra.mxu0 0
      %275 = vmatpush.bf16.msra.mxu0 0
      %276 = vmatpush.bf16.msra.mxu0 0
      %277 = vmatpush.bf16.msra.mxu0 0
      %278 = vmatpush.bf16.msra.mxu0 0
      %279 = vmatpush.bf16.msra.mxu0 0
      %280 = vmatpush.bf16.msra.mxu0 %v258
      %281 = vmatpush.bf16.msra.mxu0 %v257
      %282 = vmatmul.bf16.gmra.mxu0 %v263
      %v283 = vpop.f32.mrf.mxu0
      %v284 = vadd.f32 %v247, %v283
      %v285 = vpop.f32.mrf.mxu0
      %v286 = vadd.f32 %v247, %v285
      %287 = vmatmul.bf16.gmra.mxu0 %v266
      %v288 = vpop.f32.mrf.mxu0
      %v289 = vadd.f32 %v247, %v288
      %v290 = vpop.f32.mrf.mxu0
      %v291 = vadd.f32 %v247, %v290
      %292 = vmatmul.bf16.gmra.mxu0 %v269
      %v293 = vpop.f32.mrf.mxu0
      %v294 = vadd.f32 %v247, %v293
      %v295 = vpop.f32.mrf.mxu0
      %v296 = vadd.f32 %v247, %v295
      %297 = vmatmul.bf16.gmra.mxu0 %v272
      %v298 = vpop.f32.mrf.mxu0
      %v299 = vadd.f32 %v247, %v298
      %v300 = vpop.f32.mrf.mxu0
      %v301 = vadd.f32 %v247, %v300
      %302 = vdwg.mxu0
      %v303 = vld [vmem:[%s3] sm:$0xf]
      %v304 = vld [vmem:[%s3 + $0x4] sm:$0xf]
      %v305 = vld [vmem:[%s3 + $0x8] sm:$0xf]
      %v306 = vld [vmem:[%s3 + $0xc] sm:$0xf]
      %v311 = vunpack.c.l.b16 %v303
      %v312 = vunpack.c.l.b16 %v304
      %v313 = vunpack.c.l.b16 %v305
      %v314 = vunpack.c.l.b16 %v306
      %v315 = vpack.c.b16 %v312, %v311
      %v316 = vpack.c.b16 %v314, %v313
      %319 = vmatpush.bf16.msra.mxu0 0
      %320 = vmatpush.bf16.msra.mxu0 0
      %321 = vmatpush.bf16.msra.mxu0 0
      %322 = vmatpush.bf16.msra.mxu0 0
      %323 = vmatpush.bf16.msra.mxu0 0
      %324 = vmatpush.bf16.msra.mxu0 0
      %325 = vmatpush.bf16.msra.mxu0 %v316
      %326 = vmatpush.bf16.msra.mxu0 %v315
      %327 = vmatmul.bf16.gmra.mxu0 %v263
      %v328 = vpop.f32.mrf.mxu0
      %v329 = vadd.f32 0.0, %v328
      %v330 = vpop.f32.mrf.mxu0
      %v331 = vadd.f32 0.0, %v330
      %332 = vmatmul.bf16.gmra.mxu0 %v266
      %v333 = vpop.f32.mrf.mxu0
      %v334 = vadd.f32 0.0, %v333
      %v335 = vpop.f32.mrf.mxu0
      %v336 = vadd.f32 0.0, %v335
      %337 = vmatmul.bf16.gmra.mxu0 %v269
      %v338 = vpop.f32.mrf.mxu0
      %v339 = vadd.f32 0.0, %v338
      %v340 = vpop.f32.mrf.mxu0
      %v341 = vadd.f32 0.0, %v340
      %342 = vmatmul.bf16.gmra.mxu0 %v272
      %v343 = vpop.f32.mrf.mxu0
      %v344 = vadd.f32 0.0, %v343
      %v345 = vpop.f32.mrf.mxu0
      %v346 = vadd.f32 0.0, %v345
      %347 = vdwg.mxu0
      %v348 = vpack.c.bf16 %v331, %v329
      %v349 = vpack.c.bf16 %v336, %v334
      %v350 = vpack.c.bf16 %v341, %v339
      %v351 = vpack.c.bf16 %v346, %v344
      %v352 = vld [vmem:[%s4] sm:$0xf]
      %vm353 = vcmask 64512
      %v355 = vsel %vm353, %v348, 0
      %v358 = vsel %vm353, %v349, 0
      %v361 = vsel %vm353, %v350, 0
      %v364 = vsel %vm353, %v351, 0
      %vm366 = vcmask 1043456
      %v368 = vsel %vm366, %v352, 0
      %370 = vmatpush.bf16.msra.mxu0 0
      %371 = vmatpush.bf16.msra.mxu0 0
      %372 = vmatpush.bf16.msra.mxu0 0
      %373 = vmatpush.bf16.msra.mxu0 0
      %374 = vmatpush.bf16.msra.mxu0 0
      %375 = vmatpush.bf16.msra.mxu0 0
      %376 = vmatpush.bf16.msra.mxu0 0
      %377 = vmatpush.bf16.msra.mxu0 %v368
      %378 = vmatmul.bf16.gmra.mxu0 %v355
      %v379 = vpop.f32.mrf.mxu0
      %v380 = vadd.f32 0.0, %v379
      %v381 = vpop.f32.mrf.mxu0
      %v382 = vadd.f32 0.0, %v381
      %383 = vmatmul.bf16.gmra.mxu0 %v358
      %v384 = vpop.f32.mrf.mxu0
      %v385 = vadd.f32 0.0, %v384
      %v386 = vpop.f32.mrf.mxu0
      %v387 = vadd.f32 0.0, %v386
      %388 = vmatmul.bf16.gmra.mxu0 %v361
      %v389 = vpop.f32.mrf.mxu0
      %v390 = vadd.f32 0.0, %v389
      %v391 = vpop.f32.mrf.mxu0
      %v392 = vadd.f32 0.0, %v391
      %393 = vmatmul.bf16.gmra.mxu0 %v364
      %v394 = vpop.f32.mrf.mxu0
      %v395 = vadd.f32 0.0, %v394
      %v396 = vpop.f32.mrf.mxu0
      %v397 = vadd.f32 0.0, %v396
      %398 = vdwg.mxu0
      %v399 = vadd.f32 %v284, %v380
      %v400 = vadd.f32 %v286, %v382
      %v401 = vadd.f32 %v289, %v385
      %v402 = vadd.f32 %v291, %v387
      %v403 = vadd.f32 %v294, %v390
      %v404 = vadd.f32 %v296, %v392
      %v405 = vadd.f32 %v299, %v395
      %v406 = vadd.f32 %v301, %v397
      %vm407 = vcmask 785408
      %408 = vst.msk [vmem:[%s226] sm:$0xff] %vm407, %v399
      %409 = vst.msk [vmem:[%s226 + $0x8] sm:$0xff] %vm407, %v400
      %410 = vst.msk [vmem:[%s226 + $0x10] sm:$0xff] %vm407, %v401
      %411 = vst.msk [vmem:[%s226 + $0x18] sm:$0xff] %vm407, %v402
      %412 = vst.msk [vmem:[%s226 + $0x20] sm:$0xff] %vm407, %v403
      %413 = vst.msk [vmem:[%s226 + $0x28] sm:$0xff] %vm407, %v404
      %414 = vst.msk [vmem:[%s226 + $0x30] sm:$0xff] %vm407, %v405
      %415 = vst.msk [vmem:[%s226 + $0x38] sm:$0xff] %vm407, %v406
      %s416 = smul.u32 8, %s16
      %p417 = scmp.lt.s32.totalorder %s416, 15
      %s418 = scalar_select %p417, %s416, 15
      %s419 = smul.addr %s418, 8
      %s420 = scalar_lea.vmem %s5, %s419
      // Predicated region
      $region41: #{tpu_custom_call.1} parent=39 // pred_check
        %p421 = pneg %p144
      $region42: #{tpu_custom_call.1} parent=39 // pred_check_branch
        %423 = sbr.rel (%p421) target = $region44
      $region43: #{tpu_custom_call.1} parent=39 // pred_region
        %s424 = smul.u32 8, %s16
      $region44: #{tpu_custom_call.1} parent=39 // pred_fallthru
        _
    $region40: #{tpu_custom_call.1} parent=5 // pred_fallthru
      _
    %p425 = scmp.le.s32.totalorder 2, %s11
    // Predicated region
    $region45: #{tpu_custom_call.1} parent=5 // pred_check
      %p426 = pneg %p425
    $region46: #{tpu_custom_call.1} parent=5 // pred_check_branch
      %428 = sbr.rel (%p426) target = $region48
    $region47: #{tpu_custom_call.1} parent=5 // pred_region
      %s429 = ssub.s32 %s11, 2
      // Predicated region
      $region49: #{tpu_custom_call.1} parent=47 // pred_check
        %p430 = pneg %p150
      $region50: #{tpu_custom_call.1} parent=47 // pred_check_branch
        %432 = sbr.rel (%p430) target = $region52
      $region51: #{tpu_custom_call.1} parent=47 // pred_region
        %s433 = smul.u32 8, %s17
        %p434 = scmp.lt.s32.totalorder %s433, 15
        %s435 = scalar_select %p434, %s433, 15
        %s436 = smul.addr %s435, 8
        %s437 = scalar_lea.vmem %s5, %s436
      $region52: #{tpu_custom_call.1} parent=47 // pred_fallthru
        _
    $region48: #{tpu_custom_call.1} parent=5 // pred_fallthru
      _
  $region6: #{tpu_custom_call.1} parent=0 // loop_footer
    %s15 = sadd.s32 1, %s11
  $region7: #{tpu_custom_call.1} parent=0 // loop_footer_branch
    %10 = sbr.rel target = $region3
  $region8: #{tpu_custom_call.1} parent=0 // loop_exit
    _

</llo_original>
